<compile_context>
chip_gen: v5e
topology: v5e:2x2
jax: 0.10.0
libtpu: 0.0.40
codegen_flags: <defaults>
</compile_context>

<pallas_src>
import jax
import jax.numpy as jnp
from jax import lax
from jax.experimental import pallas as pl
from jax.experimental.pallas import tpu as pltpu


def _num_tensorcores():
    """Best-effort TensorCore count for the local chip (1 on v5e/v6e)."""
    try:
        info = pltpu.get_tpu_info()
    except Exception:
        return 1
    for name in ("num_cores", "core_count", "num_tensorcores",
                 "tensorcore_count", "num_tensor_cores", "cores_per_chip"):
        val = getattr(info, name, None)
        if isinstance(val, int) and 1 <= val <= 8:
            return val
    return 1


def _choose_view(n_elems, lead, last, sublane):
    """Pick a free (bitcast) 2-D view (rows, width) of the flat data.

    Prefer a lane-dense width (multiple of 128) with rows a multiple of the
    packed sublane tile; fall back to the original trailing dim (correct but
    lane-padded in VMEM).
    """
    for w in (512, 256, 128):
        if n_elems % (sublane * w) == 0:
            return n_elems // w, w
    for w in (512, 256, 128):
        if n_elems % w == 0:
            return n_elems // w, w
    # TODO(synk): pathological case (no 128-divisor and a huge trailing dim)
    # would also want a column split; rare enough to leave untiled.
    return lead, last


def _make_partial_sq_dist_kernel(block_rows, width, acc_rows, chunk, unroll):
    """Grid = (core shard, sequential reduction step).

    dp2_ref / dn2_ref are (acc_rows, width) f32 output blocks (one per shard)
    that stay VMEM-resident across the reduction axis.  All per-chunk
    intermediates live in loop-carried vregs.
    """
    n_chunks = block_rows // chunk
    fold = chunk // acc_rows

    def kernel(a_ref, p_ref, n_ref, dp2_ref, dn2_ref):
        @pl.when(pl.program_id(1) == 0)
        def _():
            dp2_ref[...] = jnp.zeros_like(dp2_ref)
            dn2_ref[...] = jnp.zeros_like(dn2_ref)

        def body(i, carry):
            dp2, dn2 = carry
            start = pl.multiple_of(i * chunk, chunk)
            a = a_ref[pl.ds(start, chunk), :].astype(jnp.float32)
            p = p_ref[pl.ds(start, chunk), :].astype(jnp.float32)
            n = n_ref[pl.ds(start, chunk), :].astype(jnp.float32)
            dpd = a - p
            dnd = a - n
            if fold > 1:
                # Fold the chunk's rows down to acc_rows sublanes: the reshape
                # only splits the leading (sublane-major) axis; pure VALU adds.
                dp2 = dp2 + jnp.sum((dpd * dpd).reshape(fold, acc_rows, width), axis=0)
                dn2 = dn2 + jnp.sum((dnd * dnd).reshape(fold, acc_rows, width), axis=0)
            else:
                dp2 = dp2 + dpd * dpd
                dn2 = dn2 + dnd * dnd
            return dp2, dn2

        zero = jnp.zeros((acc_rows, width), jnp.float32)
        dp2, dn2 = lax.fori_loop(0, n_chunks, body, (zero, zero), unroll=unroll)
        dp2_ref[...] += dp2
        dn2_ref[...] += dn2

    return kernel


def triplet_loss(anchor, positive, negative,
                 anchor_label=None, negative_label=None, *,
                 margin=100.0, target_block_bytes=1 * 1024 * 1024,
                 num_cores=None):
    """anchor/positive/negative: same-shaped arrays; labels unused by forward()."""
    del anchor_label, negative_label  # not used by TripletLoss.forward

    assert positive.shape == anchor.shape and negative.shape == anchor.shape
    dtype = anchor.dtype
    itemsize = jnp.dtype(dtype).itemsize
    sublane = max(8, 32 // itemsize)          # packed sublane tile: f32=8, bf16=16, i8=32

    last = anchor.shape[-1] if anchor.ndim else 1
    n_elems = anchor.size
    lead = n_elems // max(last, 1)

    # Free, bitcast re-view of the flat data (the loss sums every element).
    rows, width = _choose_view(n_elems, lead, last, sublane)
    a2d = jnp.reshape(anchor, (rows, width))
    p2d = jnp.reshape(positive, (rows, width))
    n2d = jnp.reshape(negative, (rows, width))

    # --- tile sizing (VMEM footprint uses the lane-padded width) ------------
    padded_w = -(-width // 128) * 128
    bytes_per_row = padded_w * itemsize
    target_rows = max(sublane,
                      (target_block_bytes // bytes_per_row) // sublane * sublane)

    if rows >= 8:
        block_rows = min(target_rows, rows // 8 * 8)
        acc_rows = 8
    else:
        block_rows = rows                     # tiny input: block == full dims
        acc_rows = rows

    # Rows processed per fori_loop step (kept in vregs).
    if block_rows >= sublane and block_rows % sublane == 0:
        chunk = sublane
    elif block_rows % 8 == 0:
        chunk = 8
    else:
        chunk = block_rows
    n_chunks = block_rows // chunk
    unroll = 4 if n_chunks % 4 == 0 else (2 if n_chunks % 2 == 0 else 1)

    # --- grid: (TensorCore shard, sequential reduction) ---------------------
    nb_full = rows // block_rows              # >= 1 by construction
    n_tc = num_cores if num_cores is not None else _num_tensorcores()
    n_par = n_tc if (n_tc > 1 and nb_full >= n_tc) else 1
    n_red = nb_full // n_par
    nb_used = n_par * n_red
    used_rows = nb_used * block_rows          # tail rows handled in epilogue

    grid = (n_par, n_red)
    emb_spec = pl.BlockSpec((block_rows, width), lambda pi, ri: (pi * n_red + ri, 0))
    acc_spec = pl.BlockSpec((acc_rows, width), lambda pi, ri: (pi, 0))
    acc_shape = jax.ShapeDtypeStruct((n_par * acc_rows, width), jnp.float32)

    kernel = _make_partial_sq_dist_kernel(block_rows, width, acc_rows, chunk, unroll)

    # VMEM budget: 3 inputs x 2 pipeline buffers + 2 resident accumulators.
    tile_bytes = block_rows * padded_w * itemsize
    acc_bytes = max(acc_rows, 8) * padded_w * 4
    needed = 3 * 2 * tile_bytes + 2 * 2 * acc_bytes + (2 << 20)
    vmem_limit = None
    if needed > 12 * 1024 * 1024:             # approaching v5e's 16 MiB default
        vmem_limit = int(min(needed * 5 // 4, 64 * 1024 * 1024))

    # Explicit cross-core sharding on multi-TC chips; safe fallback otherwise.
    sem_options = [("parallel", "arbitrary")]
    if n_par > 1:
        sem_options.insert(0, (pltpu.CORE_PARALLEL, pltpu.ARBITRARY))

    result = None
    last_err = None
    for sem in sem_options:
        params = {"dimension_semantics": sem}
        if vmem_limit is not None:
            params["vmem_limit_bytes"] = vmem_limit
        try:
            result = pl.pallas_call(
                kernel,
                out_shape=(acc_shape, acc_shape),
                grid_spec=pltpu.PrefetchScalarGridSpec(
                    num_scalar_prefetch=0,
                    grid=grid,
                    in_specs=[emb_spec, emb_spec, emb_spec],
                    out_specs=[acc_spec, acc_spec],
                ),
                compiler_params=pltpu.CompilerParams(**params),
            )(a2d, p2d, n2d)
            break
        except Exception as e:                # e.g. CORE_PARALLEL unsupported
            last_err = e
    if result is None:
        raise last_err
    dp2_part, dn2_part = result

    # Tiny epilogue: final cross-lane reduce, tail rows, sqrt guard, margin.
    dp2 = jnp.sum(dp2_part)
    dn2 = jnp.sum(dn2_part)
    if used_rows < rows:                      # < n_par*block_rows rows, no pad/copy
        at = a2d[used_rows:].astype(jnp.float32)
        pt = p2d[used_rows:].astype(jnp.float32)
        nt = n2d[used_rows:].astype(jnp.float32)
        dp2 = dp2 + jnp.sum(jnp.square(at - pt))
        dn2 = dn2 + jnp.sum(jnp.square(at - nt))

    # `if not distance == 0: distance = sqrt(distance)` -- forward value is
    # identical to plain sqrt, but keep the guard explicitly.
    dp = jnp.where(dp2 == 0.0, 0.0, jnp.sqrt(dp2))
    dn = jnp.where(dn2 == 0.0, 0.0, jnp.sqrt(dn2))
    loss = jax.nn.relu(dp - dn + jnp.float32(margin))
    return loss, dp, dn


def _reference(anchor, positive, negative, margin=100.0):
    a = anchor.astype(jnp.float32)
    p = positive.astype(jnp.float32)
    n = negative.astype(jnp.float32)
    dp = jnp.sqrt(jnp.sum((a - p) ** 2))
    dn = jnp.sqrt(jnp.sum((a - n) ** 2))
    return jax.nn.relu(dp - dn + margin), dp, dn


def _check(out, ref):
    loss, dp, dn = out
    ref_loss, ref_dp, ref_dn = ref
    assert jnp.allclose(loss, ref_loss, rtol=1e-5, atol=1e-4)
    assert jnp.allclose(dp, ref_dp, rtol=1e-5, atol=1e-4)
    assert jnp.allclose(dn, ref_dn, rtol=1e-5, atol=1e-4)


if __name__ == "__main__":
    key = jax.random.PRNGKey(0)
    k1, k2, k3 = jax.random.split(key, 3)

    # Case 1: small batch -> single tile, single grid step (labels are
    # accepted and ignored, like the PyTorch forward()).
    B, D = 16, 128
    anchor = jax.random.normal(k1, (B, D), jnp.float32)
    positive = jax.random.normal(k2, (B, D), jnp.float32)
    negative = jax.random.normal(k3, (B, D), jnp.float32)
    out = triplet_loss(anchor, positive, negative, 3.0, 7.0)
    jax.block_until_ready(out)
    _check(out, _reference(anchor, positive, negative))

    # Case 2: force tiny tiles to exercise the multi-step reduction axis
    # (and the multi-core split / tail epilogue on multi-TC chips).
    B2 = 72
    a2 = jax.random.normal(k1, (B2, D), jnp.float32)
    p2 = jax.random.normal(k2, (B2, D), jnp.float32)
    n2 = jax.random.normal(k3, (B2, D), jnp.float32)
    out2 = triplet_loss(a2, p2, n2, target_block_bytes=8 * D * 4)
    jax.block_until_ready(out2)
    _check(out2, _reference(a2, p2, n2))

    # Case 3: non-2D input whose element count is not tile-aligned ->
    # exercises the free flatten re-view and the no-pad tail epilogue.
    shp3 = (2, 9, 64)
    a3 = jax.random.normal(k1, shp3, jnp.float32)
    p3 = jax.random.normal(k2, shp3, jnp.float32)
    n3 = jax.random.normal(k3, shp3, jnp.float32)
    out3 = triplet_loss(a3, p3, n3)
    jax.block_until_ready(out3)
    _check(out3, _reference(a3, p3, n3))

    print("KERNEL_OK")
</pallas_src>

<mosaic_0001>
module attributes {stable_mosaic.version = 11 : i64} {
  func.func @kernel(%arg0: i32, %arg1: i32, %arg2: memref<8x256xf32, #tpu.memory_space<vmem>>, %arg3: memref<8x256xf32, #tpu.memory_space<vmem>>, %arg4: memref<8x256xf32, #tpu.memory_space<vmem>>, %arg5: memref<8x256xf32, #tpu.memory_space<vmem>>, %arg6: memref<8x256xf32, #tpu.memory_space<vmem>>) attributes {dimension_semantics = [#tpu.dimension_semantics<parallel>, #tpu.dimension_semantics<arbitrary>], iteration_bounds = array<i64: 1, 1>, scalar_prefetch = 0 : i64, scratch_operands = 0 : i64, tpu.core_type = #tpu.core_type<tc>, window_params = [{transform_indices = @transform_0, window_bounds = array<i64: 8, 256>}, {transform_indices = @transform_1, window_bounds = array<i64: 8, 256>}, {transform_indices = @transform_2, window_bounds = array<i64: 8, 256>}, {transform_indices = @transform_3, window_bounds = array<i64: 8, 256>}, {transform_indices = @transform_4, window_bounds = array<i64: 8, 256>}]} {
    %c0_i32 = arith.constant 0 : i32
    %0 = arith.cmpi eq, %arg1, %c0_i32 : i32
    %1 = arith.extui %0 : i1 to i32
    %c0_i32_0 = arith.constant 0 : i32
    %2 = arith.cmpi ne, %1, %c0_i32_0 : i32
    scf.if %2 {
      %cst_12 = arith.constant 0.000000e+00 : f32
      %24 = vector.broadcast %cst_12 : f32 to vector<8x256xf32>
      %c0_13 = arith.constant 0 : index
      %c0_14 = arith.constant 0 : index
      %25 = vector.load %arg5[%c0_13, %c0_14] : memref<8x256xf32, #tpu.memory_space<vmem>>, vector<8x256xf32>
      tpu.vector_store %arg5[%c0_13, %c0_14], %24 {strides = array<i32>} : memref<8x256xf32, #tpu.memory_space<vmem>>, vector<8x256xf32>,
      %cst_15 = arith.constant 0.000000e+00 : f32
      %26 = vector.broadcast %cst_15 : f32 to vector<8x256xf32>
      %c0_16 = arith.constant 0 : index
      %c0_17 = arith.constant 0 : index
      %27 = vector.load %arg6[%c0_16, %c0_17] : memref<8x256xf32, #tpu.memory_space<vmem>>, vector<8x256xf32>
      tpu.vector_store %arg6[%c0_16, %c0_17], %26 {strides = array<i32>} : memref<8x256xf32, #tpu.memory_space<vmem>>, vector<8x256xf32>,
    } else {
    }
    %cst = arith.constant 0.000000e+00 : f32
    %3 = vector.broadcast %cst : f32 to vector<8x256xf32>
    %c0_i32_1 = arith.constant 0 : i32
    %c8_i32 = arith.constant 8 : i32
    %4 = arith.muli %c0_i32_1, %c8_i32 : i32
    %5 = tpu.assume_multiple %4, 8 : i32
    %6 = arith.index_cast %5 : i32 to index
    %c0 = arith.constant 0 : index
    %7 = vector.load %arg2[%6, %c0] : memref<8x256xf32, #tpu.memory_space<vmem>>, vector<8x256xf32>
    %8 = arith.index_cast %5 : i32 to index
    %c0_2 = arith.constant 0 : index
    %9 = vector.load %arg3[%8, %c0_2] : memref<8x256xf32, #tpu.memory_space<vmem>>, vector<8x256xf32>
    %10 = arith.index_cast %5 : i32 to index
    %c0_3 = arith.constant 0 : index
    %11 = vector.load %arg4[%10, %c0_3] : memref<8x256xf32, #tpu.memory_space<vmem>>, vector<8x256xf32>
    %12 = arith.subf %7, %9 : vector<8x256xf32>
    %13 = arith.subf %7, %11 : vector<8x256xf32>
    %14 = arith.mulf %12, %12 : vector<8x256xf32>
    %15 = arith.addf %3, %14 : vector<8x256xf32>
    %16 = arith.mulf %13, %13 : vector<8x256xf32>
    %17 = arith.addf %3, %16 : vector<8x256xf32>
    %c1_i32 = arith.constant 1 : i32
    %c0_4 = arith.constant 0 : index
    %c0_5 = arith.constant 0 : index
    %18 = vector.load %arg5[%c0_4, %c0_5] : memref<8x256xf32, #tpu.memory_space<vmem>>, vector<8x256xf32>
    %19 = arith.addf %18, %15 : vector<8x256xf32>
    %c0_6 = arith.constant 0 : index
    %c0_7 = arith.constant 0 : index
    %20 = vector.load %arg5[%c0_6, %c0_7] : memref<8x256xf32, #tpu.memory_space<vmem>>, vector<8x256xf32>
    tpu.vector_store %arg5[%c0_6, %c0_7], %19 {strides = array<i32>} : memref<8x256xf32, #tpu.memory_space<vmem>>, vector<8x256xf32>,
    %c0_8 = arith.constant 0 : index
    %c0_9 = arith.constant 0 : index
    %21 = vector.load %arg6[%c0_8, %c0_9] : memref<8x256xf32, #tpu.memory_space<vmem>>, vector<8x256xf32>
    %22 = arith.addf %21, %17 : vector<8x256xf32>
    %c0_10 = arith.constant 0 : index
    %c0_11 = arith.constant 0 : index
    %23 = vector.load %arg6[%c0_10, %c0_11] : memref<8x256xf32, #tpu.memory_space<vmem>>, vector<8x256xf32>
    tpu.vector_store %arg6[%c0_10, %c0_11], %22 {strides = array<i32>} : memref<8x256xf32, #tpu.memory_space<vmem>>, vector<8x256xf32>,
    return
  }
  func.func @transform_0(%arg0: i32, %arg1: i32) -> (i32, i32) {
    %c1_i32 = arith.constant 1 : i32
    %0 = arith.muli %arg0, %c1_i32 : i32
    %1 = arith.addi %0, %arg1 : i32
    %c0_i32 = arith.constant 0 : i32
    %c0_i32_0 = arith.constant 0 : i32
    return %1, %c0_i32 : i32, i32
  }
  func.func @transform_1(%arg0: i32, %arg1: i32) -> (i32, i32) {
    %c1_i32 = arith.constant 1 : i32
    %0 = arith.muli %arg0, %c1_i32 : i32
    %1 = arith.addi %0, %arg1 : i32
    %c0_i32 = arith.constant 0 : i32
    %c0_i32_0 = arith.constant 0 : i32
    return %1, %c0_i32 : i32, i32
  }
  func.func @transform_2(%arg0: i32, %arg1: i32) -> (i32, i32) {
    %c1_i32 = arith.constant 1 : i32
    %0 = arith.muli %arg0, %c1_i32 : i32
    %1 = arith.addi %0, %arg1 : i32
    %c0_i32 = arith.constant 0 : i32
    %c0_i32_0 = arith.constant 0 : i32
    return %1, %c0_i32 : i32, i32
  }
  func.func @transform_3(%arg0: i32, %arg1: i32) -> (i32, i32) {
    %c0_i32 = arith.constant 0 : i32
    %c0_i32_0 = arith.constant 0 : i32
    return %arg0, %c0_i32 : i32, i32
  }
  func.func @transform_4(%arg0: i32, %arg1: i32) -> (i32, i32) {
    %c0_i32 = arith.constant 0 : i32
    %c0_i32_0 = arith.constant 0 : i32
    return %arg0, %c0_i32 : i32, i32
  }
}

</mosaic_0001>

<llo_original>
// kernel: tpu_custom_call.1
$region0: #{tpu_custom_call.1}
  #allocation0 [shape = 'u32[]', space=smem, size = 0x4, offset = 0x4, fixed_abs, tag = 'smem constant byte address 0x4 - core index']
  #allocation1 [shape = 'u32[72,128]{1,0:T(1,128)}', space=vmem, size = 0x9000, scoped, tag = 'internal scratch']
  %s0 = inlined_call_operand.hbm [shape: f32[8,256], index: 0, kind: input, shape index: {}]
  %s1 = inlined_call_operand.hbm [shape: f32[8,256], index: 1, kind: input, shape index: {}]
  %s2 = inlined_call_operand.hbm [shape: f32[8,256], index: 2, kind: input, shape index: {}]
  %s3 = inlined_call_operand.hbm [shape: f32[8,256], index: 3, kind: output, shape index: {0}]
  %s4 = inlined_call_operand.hbm [shape: f32[8,256], index: 4, kind: output, shape index: {1}]
  %5 = xla_tuple %s3, %s4
  %s6 = sld [smem:[#allocation0]]
  $region46: #{tpu_custom_call.1} parent=0
    _
  %s8 = ssub.s32 1, %s6
  %s9 = scalar_select 0, %s8, %s6
  $region1: #{tpu_custom_call.1} parent=0
    #allocation2 [shape = 'u8[8192]{0}', space=vmem, size = 0x2000, scoped, tag = 'input window, operand 0, single buffered']
    #allocation3 [shape = 's32[1]{0}', space=sflag, size = 0x4, scoped, tag = 'scoped memory for tpu_custom_call.1']
    #allocation4 [shape = 's32[1]{0}', space=sflag, size = 0x4, scoped, tag = 'scoped memory for tpu_custom_call.1']
    #allocation5 [shape = 'u8[8192]{0}', space=vmem, size = 0x2000, scoped, tag = 'input window, operand 1, single buffered']
    #allocation6 [shape = 's32[1]{0}', space=sflag, size = 0x4, scoped, tag = 'scoped memory for tpu_custom_call.1']
    #allocation7 [shape = 'u8[8192]{0}', space=vmem, size = 0x2000, scoped, tag = 'input window, operand 2, single buffered']
    #allocation8 [shape = 'u8[8192]{0}', space=vmem, size = 0x2000, scoped, tag = 'output window, operand 0, single buffered']
    #allocation9 [shape = 'u8[8192]{0}', space=vmem, size = 0x2000, scoped, tag = 'output window, operand 1, single buffered']
    #allocation10 [shape = 's32[1]{0}', space=sflag, size = 0x4, scoped, tag = 'scoped memory for tpu_custom_call.1']
    %10 = vsyncpa [#allocation3], 0
    %11 = vsyncpa [#allocation6], 0
    %12 = vsyncpa [#allocation4], 0
    %13 = vsyncpa [#allocation10], 0
    // Predicated region
    $region2: #{tpu_custom_call.1} parent=1 // pred_check
      _
    $region3: #{tpu_custom_call.1} parent=1 // pred_check_branch
      %15 = sbr.rel (0) target = $region5
    $region4: #{tpu_custom_call.1} parent=1 // pred_region
      %s16 = sadd.s32 0, 0
      %18 = vsyncadd [#allocation3], 0
      %s19 = smul.addr %s16, 2
      %s20 = smul.addr %s19, 8
      %s21 = scalar_lea.hbm %s0, %s20
      %s23 = sshll.u32 %s21, 4
      %s24 = int_to_ptr.hbm [resolvable:$true] %s23
      %s25 = sshll.u32 [#allocation2], 4
      %s26 = int_to_ptr.vmem [resolvable:$true] %s25
      %28 = dma.hbm_to_vmem [thread:$0]  %s24, 256, %s26, [#allocation3]
    $region5: #{tpu_custom_call.1} parent=1 // pred_fallthru
      _
    // Predicated region
    $region6: #{tpu_custom_call.1} parent=1 // pred_check
      _
    $region7: #{tpu_custom_call.1} parent=1 // pred_check_branch
      %30 = sbr.rel (0) target = $region9
    $region8: #{tpu_custom_call.1} parent=1 // pred_region
      %s31 = sadd.s32 0, 0
      %33 = vsyncadd [#allocation6], 0
      %s34 = smul.addr %s31, 2
      %s35 = smul.addr %s34, 8
      %s36 = scalar_lea.hbm %s1, %s35
      %s38 = sshll.u32 %s36, 4
      %s39 = int_to_ptr.hbm [resolvable:$true] %s38
      %s40 = sshll.u32 [#allocation5], 4
      %s41 = int_to_ptr.vmem [resolvable:$true] %s40
      %43 = dma.hbm_to_vmem [thread:$0]  %s39, 256, %s41, [#allocation6]
    $region9: #{tpu_custom_call.1} parent=1 // pred_fallthru
      _
    // Predicated region
    $region10: #{tpu_custom_call.1} parent=1 // pred_check
      _
    $region11: #{tpu_custom_call.1} parent=1 // pred_check_branch
      %45 = sbr.rel (0) target = $region13
    $region12: #{tpu_custom_call.1} parent=1 // pred_region
      %s46 = sadd.s32 0, 0
      %48 = vsyncadd [#allocation6], 0
      %s49 = smul.addr %s46, 2
      %s50 = smul.addr %s49, 8
      %s51 = scalar_lea.hbm %s2, %s50
      %s53 = sshll.u32 %s51, 4
      %s54 = int_to_ptr.hbm [resolvable:$true] %s53
      %s55 = sshll.u32 [#allocation7], 4
      %s56 = int_to_ptr.vmem [resolvable:$true] %s55
      %58 = dma.hbm_to_vmem [thread:$0]  %s54, 256, %s56, [#allocation6]
    $region13: #{tpu_custom_call.1} parent=1 // pred_fallthru
      _
    // Predicated region
    $region14: #{tpu_custom_call.1} parent=1 // pred_check
      _
    $region15: #{tpu_custom_call.1} parent=1 // pred_check_branch
      %60 = sbr.rel (0) target = $region17
    $region16: #{tpu_custom_call.1} parent=1 // pred_region
      %62 = dma.done [#allocation3], 256
    $region17: #{tpu_custom_call.1} parent=1 // pred_fallthru
      _
    // Predicated region
    $region18: #{tpu_custom_call.1} parent=1 // pred_check
      _
    $region19: #{tpu_custom_call.1} parent=1 // pred_check_branch
      %64 = sbr.rel (0) target = $region21
    $region20: #{tpu_custom_call.1} parent=1 // pred_region
      %66 = dma.done [#allocation6], 256
    $region21: #{tpu_custom_call.1} parent=1 // pred_fallthru
      _
    // Predicated region
    $region22: #{tpu_custom_call.1} parent=1 // pred_check
      _
    $region23: #{tpu_custom_call.1} parent=1 // pred_check_branch
      %68 = sbr.rel (0) target = $region25
    $region24: #{tpu_custom_call.1} parent=1 // pred_region
      %70 = dma.done [#allocation6], 256
    $region25: #{tpu_custom_call.1} parent=1 // pred_fallthru
      _
    %s71 = sadd.s32 0, 0
    %s72 = sadd.s32 0, 0
    %s73 = sadd.s32 0, 0
    %p74 = scmp.eq.s32.totalorder 0, 0
    // Predicated region
    $region26: #{tpu_custom_call.1} parent=1 // pred_check
      %p75 = pneg %p74
    $region27: #{tpu_custom_call.1} parent=1 // pred_check_branch
      %77 = sbr.rel (%p75) target = $region29
    $region28: #{tpu_custom_call.1} parent=1 // pred_region
      %78 = vst [vmem:[#allocation8] sm:$0xff] 0.0
      %79 = vst [vmem:[#allocation8 + $0x8] sm:$0xff] 0.0
      %80 = vst [vmem:[#allocation9] sm:$0xff] 0.0
      %81 = vst [vmem:[#allocation9 + $0x8] sm:$0xff] 0.0
    $region29: #{tpu_custom_call.1} parent=1 // pred_fallthru
      _
    %s82 = smul.u32 0, 2
    %s83 = smul.addr %s82, 8
    %s84 = scalar_lea.vmem [#allocation2], %s83
    %v85 = vld [vmem:[%s84] sm:$0xff]
    %v86 = vld [vmem:[%s84 + $0x8] sm:$0xff]
    %s87 = smul.addr %s82, 8
    %s88 = scalar_lea.vmem [#allocation5], %s87
    %v89 = vld [vmem:[%s88] sm:$0xff]
    %v90 = vld [vmem:[%s88 + $0x8] sm:$0xff]
    %s91 = smul.addr %s82, 8
    %s92 = scalar_lea.vmem [#allocation7], %s91
    %v93 = vld [vmem:[%s92] sm:$0xff]
    %v94 = vld [vmem:[%s92 + $0x8] sm:$0xff]
    %v95 = vsub.f32 %v85, %v89
    %v96 = vsub.f32 %v86, %v90
    %v97 = vsub.f32 %v85, %v93
    %v98 = vsub.f32 %v86, %v94
    %v99 = vmul.f32 %v95, %v95
    %v100 = vmul.f32 %v96, %v96
    %v101 = vadd.f32 %v99, 0.0
    %v102 = vadd.f32 %v100, 0.0
    %v103 = vmul.f32 %v97, %v97
    %v104 = vmul.f32 %v98, %v98
    %v105 = vadd.f32 %v103, 0.0
    %v106 = vadd.f32 %v104, 0.0
    %v107 = vld [vmem:[#allocation8] sm:$0xff]
    %v108 = vld [vmem:[#allocation8 + $0x8] sm:$0xff]
    %v109 = vadd.f32 %v107, %v101
    %v110 = vadd.f32 %v108, %v102
    %111 = vst [vmem:[#allocation8] sm:$0xff] %v109
    %112 = vst [vmem:[#allocation8 + $0x8] sm:$0xff] %v110
    %v113 = vld [vmem:[#allocation9] sm:$0xff]
    %v114 = vld [vmem:[#allocation9 + $0x8] sm:$0xff]
    %v115 = vadd.f32 %v113, %v105
    %v116 = vadd.f32 %v114, %v106
    %117 = vst [vmem:[#allocation9] sm:$0xff] %v115
    %118 = vst [vmem:[#allocation9 + $0x8] sm:$0xff] %v116
    // Predicated region
    $region30: #{tpu_custom_call.1} parent=1 // pred_check
      _
    $region31: #{tpu_custom_call.1} parent=1 // pred_check_branch
      %120 = sbr.rel (0) target = $region33
    $region32: #{tpu_custom_call.1} parent=1 // pred_region
      %122 = vsyncadd [#allocation4], 0
      %s124 = sshll.u32 [#allocation8], 4
      %s125 = int_to_ptr.vmem [resolvable:$true] %s124
      %s126 = sshll.u32 %s3, 4
      %s127 = int_to_ptr.hbm [resolvable:$true] %s126
      %129 = dma.vmem_to_hbm [thread:$0]  %s125, 256, %s127, [#allocation4]
    $region33: #{tpu_custom_call.1} parent=1 // pred_fallthru
      _
    // Predicated region
    $region34: #{tpu_custom_call.1} parent=1 // pred_check
      _
    $region35: #{tpu_custom_call.1} parent=1 // pred_check_branch
      %131 = sbr.rel (0) target = $region37
    $region36: #{tpu_custom_call.1} parent=1 // pred_region
      %133 = vsyncadd [#allocation10], 0
      %s135 = sshll.u32 [#allocation9], 4
      %s136 = int_to_ptr.vmem [resolvable:$true] %s135
      %s137 = sshll.u32 %s4, 4
      %s138 = int_to_ptr.hbm [resolvable:$true] %s137
      %140 = dma.vmem_to_hbm [thread:$0]  %s136, 256, %s138, [#allocation10]
    $region37: #{tpu_custom_call.1} parent=1 // pred_fallthru
      _
    // Predicated region
    $region38: #{tpu_custom_call.1} parent=1 // pred_check
      _
    $region39: #{tpu_custom_call.1} parent=1 // pred_check_branch
      %142 = sbr.rel (0) target = $region41
    $region40: #{tpu_custom_call.1} parent=1 // pred_region
      %144 = dma.done [#allocation4], 256
    $region41: #{tpu_custom_call.1} parent=1 // pred_fallthru
      _
    // Predicated region
    $region42: #{tpu_custom_call.1} parent=1 // pred_check
      _
    $region43: #{tpu_custom_call.1} parent=1 // pred_check_branch
      %146 = sbr.rel (0) target = $region45
    $region44: #{tpu_custom_call.1} parent=1 // pred_region
      %148 = dma.done [#allocation10], 256
    $region45: #{tpu_custom_call.1} parent=1 // pred_fallthru
      _
    %149 = vsyncpa [#allocation3], 1
    %150 = vsyncpa [#allocation6], 1
    %151 = vsyncpa [#allocation4], 1
    %152 = vsyncpa [#allocation10], 1

</llo_original>
